<compile_context>
chip_gen: v7x
topology: tpu7x:2x2x1
jax: 0.10.0
libtpu: 0.0.40
codegen_flags: <defaults>
</compile_context>

<pallas_src>
import jax
import jax.numpy as jnp
from jax.experimental import pallas as pl
from jax.experimental.pallas import tpu as pltpu


def _linear_kernel(w_ref, b_ref, xt_ref, o_ref):
    # w_ref: (d_in,) SMEM scalars, b_ref: (1,) SMEM scalar
    # xt_ref: (d_in, N) VMEM (lane-dense), o_ref: (1, N) VMEM (lane-dense)
    d_in = xt_ref.shape[0]
    # Unrolled VPU multiply-accumulate: acc = sum_k w[k] * xT[k, :]
    acc = xt_ref[0:1, :] * w_ref[0]            # (1, N)
    for k in range(1, d_in):
        acc = acc + xt_ref[k:k + 1, :] * w_ref[k]
    o_ref[...] = acc + b_ref[0]


def logistictest_forward(x, weight, bias):
    """x: (N, 5) f32, weight: (1, 5) f32 (PyTorch layout), bias: (1,) f32."""
    n, d_in = x.shape
    d_out = weight.shape[0]                    # 1

    xt = x.T                                   # (5, N) lane-dense input
    w = weight.reshape(d_in).astype(jnp.float32)   # (5,) scalars for SMEM
    b = bias.reshape(d_out).astype(jnp.float32)    # (1,) scalar for SMEM

    out_t = pl.pallas_call(
        _linear_kernel,
        out_shape=jax.ShapeDtypeStruct((d_out, n), jnp.float32),   # (1, N)
        in_specs=[
            pl.BlockSpec(memory_space=pltpu.MemorySpace.SMEM),     # w (5,)
            pl.BlockSpec(memory_space=pltpu.MemorySpace.SMEM),     # b (1,)
            pl.BlockSpec(memory_space=pltpu.MemorySpace.VMEM),     # xT (5, N)
        ],
        out_specs=pl.BlockSpec(memory_space=pltpu.MemorySpace.VMEM),
    )(w, b, xt)

    return out_t.T                             # back to (N, 1) PyTorch layout


if __name__ == "__main__":
    key = jax.random.PRNGKey(0)
    k_x, k_w, k_b = jax.random.split(key, 3)

    n1, d_in, d_out = 200, 5, 1

    # Input: standard-normal rows, matching np.random.multivariate_normal(0, I, 200).
    x = jax.random.normal(k_x, (n1, d_in), dtype=jnp.float32)

    # Deterministic parameter init mimicking nn.Linear default:
    # uniform(-1/sqrt(in_features), 1/sqrt(in_features)).
    bound = 1.0 / jnp.sqrt(jnp.float32(d_in))
    weight = jax.random.uniform(k_w, (d_out, d_in), jnp.float32, -bound, bound)
    bias = jax.random.uniform(k_b, (d_out,), jnp.float32, -bound, bound)

    out = logistictest_forward(x, weight, bias)
    out = jax.block_until_ready(out)

    # Cross-check against plain JAX reference.
    ref = x @ weight.T + bias
    assert out.shape == (n1, d_out)
    assert jnp.allclose(out, ref, atol=1e-5, rtol=1e-5)

    print("KERNEL_OK")
</pallas_src>

<mosaic_0001>
module attributes {stable_mosaic.version = 11 : i64} {
  func.func @_linear_kernel(%arg0: memref<5xf32, #tpu.memory_space<smem>>, %arg1: memref<1xf32, #tpu.memory_space<smem>>, %arg2: memref<5x200xf32, #tpu.memory_space<vmem>>, %arg3: memref<1x200xf32, #tpu.memory_space<vmem>>) attributes {dimension_semantics = [], scalar_prefetch = 0 : i64, scratch_operands = 0 : i64, tpu.core_type = #tpu.core_type<tc>} {
    %c0 = arith.constant 0 : index
    %c0_0 = arith.constant 0 : index
    %0 = vector.load %arg2[%c0, %c0_0] : memref<5x200xf32, #tpu.memory_space<vmem>>, vector<1x200xf32>
    %c0_1 = arith.constant 0 : index
    %1 = memref.load %arg0[%c0_1] : memref<5xf32, #tpu.memory_space<smem>>
    %2 = vector.broadcast %1 : f32 to vector<1x200xf32>
    %3 = arith.mulf %0, %2 : vector<1x200xf32>
    %c1 = arith.constant 1 : index
    %c0_2 = arith.constant 0 : index
    %4 = vector.load %arg2[%c1, %c0_2] : memref<5x200xf32, #tpu.memory_space<vmem>>, vector<1x200xf32>
    %c1_3 = arith.constant 1 : index
    %5 = memref.load %arg0[%c1_3] : memref<5xf32, #tpu.memory_space<smem>>
    %6 = vector.broadcast %5 : f32 to vector<1x200xf32>
    %7 = arith.mulf %4, %6 : vector<1x200xf32>
    %8 = arith.addf %3, %7 : vector<1x200xf32>
    %c2 = arith.constant 2 : index
    %c0_4 = arith.constant 0 : index
    %9 = vector.load %arg2[%c2, %c0_4] : memref<5x200xf32, #tpu.memory_space<vmem>>, vector<1x200xf32>
    %c2_5 = arith.constant 2 : index
    %10 = memref.load %arg0[%c2_5] : memref<5xf32, #tpu.memory_space<smem>>
    %11 = vector.broadcast %10 : f32 to vector<1x200xf32>
    %12 = arith.mulf %9, %11 : vector<1x200xf32>
    %13 = arith.addf %8, %12 : vector<1x200xf32>
    %c3 = arith.constant 3 : index
    %c0_6 = arith.constant 0 : index
    %14 = vector.load %arg2[%c3, %c0_6] : memref<5x200xf32, #tpu.memory_space<vmem>>, vector<1x200xf32>
    %c3_7 = arith.constant 3 : index
    %15 = memref.load %arg0[%c3_7] : memref<5xf32, #tpu.memory_space<smem>>
    %16 = vector.broadcast %15 : f32 to vector<1x200xf32>
    %17 = arith.mulf %14, %16 : vector<1x200xf32>
    %18 = arith.addf %13, %17 : vector<1x200xf32>
    %c4 = arith.constant 4 : index
    %c0_8 = arith.constant 0 : index
    %19 = vector.load %arg2[%c4, %c0_8] : memref<5x200xf32, #tpu.memory_space<vmem>>, vector<1x200xf32>
    %c4_9 = arith.constant 4 : index
    %20 = memref.load %arg0[%c4_9] : memref<5xf32, #tpu.memory_space<smem>>
    %21 = vector.broadcast %20 : f32 to vector<1x200xf32>
    %22 = arith.mulf %19, %21 : vector<1x200xf32>
    %23 = arith.addf %18, %22 : vector<1x200xf32>
    %c0_10 = arith.constant 0 : index
    %24 = memref.load %arg1[%c0_10] : memref<1xf32, #tpu.memory_space<smem>>
    %25 = vector.broadcast %24 : f32 to vector<1x200xf32>
    %26 = arith.addf %23, %25 : vector<1x200xf32>
    %c0_11 = arith.constant 0 : index
    %c0_12 = arith.constant 0 : index
    %27 = vector.load %arg3[%c0_11, %c0_12] : memref<1x200xf32, #tpu.memory_space<vmem>>, vector<1x200xf32>
    tpu.vector_store %arg3[%c0_11, %c0_12], %26 {strides = array<i32>} : memref<1x200xf32, #tpu.memory_space<vmem>>, vector<1x200xf32>,
    return
  }
}

</mosaic_0001>

<llo_original>
// kernel: tpu_custom_call.1
$region0: #{tpu_custom_call.1}
  #allocation0 [shape = 'u32[]', space=smem, size = 0x4, offset = 0x4, fixed_abs, tag = 'smem constant byte address 0x4 - core index']
  #allocation1 [shape = 'u32[144,128]{1,0:T(1,128)}', space=vmem, size = 0x12000, scoped, tag = 'internal scratch']
  #allocation2 [shape = 'f32[1]{0:T(128)S(6)}', space=smem, size = 0x200, scoped, tag = 'scoped memory for tpu_custom_call.1']
  %s0 = inlined_call_operand.vmem [shape: f32[5], index: 0, kind: input, shape index: {}]
  %s1 = inlined_call_operand.<no memory space> [shape: f32[1], index: 1, kind: input, shape index: {}]
  %s2 = inlined_call_operand.hbm [shape: f32[5,200], index: 2, kind: input, shape index: {}]
  %s3 = inlined_call_operand.hbm [shape: f32[1,200], index: 3, kind: output, shape index: {}]
  %s4 = sld [smem:[#allocation0]]
  $region30: #{tpu_custom_call.1} parent=0
    _
  %s6 = ssub.s32 1, %s4
  %s7 = scalar_select 0, %s6, %s4
  %8 = sst [smem:[#allocation2]] %s1
  $region1: #{tpu_custom_call.1} parent=0
    #allocation3 [shape = 'u8[512]{0}', space=smem, size = 0x200, scoped, tag = 'input window, operand 0, single buffered']
    #allocation4 [shape = 's32[1]{0}', space=sflag, size = 0x4, scoped, tag = 'scoped memory for tpu_custom_call.1']
    #allocation5 [shape = 's32[1]{0}', space=sflag, size = 0x4, scoped, tag = 'scoped memory for tpu_custom_call.1']
    #allocation6 [shape = 's32[1]{0}', space=sflag, size = 0x4, scoped, tag = 'scoped memory for tpu_custom_call.1']
    #allocation7 [shape = 'u8[8192]{0}', space=vmem, size = 0x2000, scoped, tag = 'input window, operand 2, single buffered']
    #allocation8 [shape = 'u8[1024]{0}', space=vmem, size = 0x400, scoped, tag = 'output window, operand 0, single buffered']
    %9 = vsyncpa [#allocation6], 0
    %10 = vsyncpa [#allocation4], 0
    %11 = vsyncpa [#allocation5], 0
    // Predicated region
    $region2: #{tpu_custom_call.1} parent=1 // pred_check
      _
    $region3: #{tpu_custom_call.1} parent=1 // pred_check_branch
      %13 = sbr.rel (0) target = $region5
    $region4: #{tpu_custom_call.1} parent=1 // pred_region
      %s15 = ssub.s32 16, 16
      %16 = vsyncadd [#allocation6], %s15
      %s18 = sshll.u32 %s0, 4
      %s19 = int_to_ptr.vmem [resolvable:$true] %s18
      %21 = dma.vmem_to_smem %s19, 16, [#allocation3], [#allocation6]
    $region5: #{tpu_custom_call.1} parent=1 // pred_fallthru
      _
    // Predicated region
    $region6: #{tpu_custom_call.1} parent=1 // pred_check
      _
    $region7: #{tpu_custom_call.1} parent=1 // pred_check_branch
      %23 = sbr.rel (0) target = $region9
    $region8: #{tpu_custom_call.1} parent=1 // pred_region
      _
    $region9: #{tpu_custom_call.1} parent=1 // pred_fallthru
      _
    // Predicated region
    $region10: #{tpu_custom_call.1} parent=1 // pred_check
      _
    $region11: #{tpu_custom_call.1} parent=1 // pred_check_branch
      %25 = sbr.rel (0) target = $region13
    $region12: #{tpu_custom_call.1} parent=1 // pred_region
      %s27 = ssub.s32 256, 256
      %28 = vsyncadd [#allocation4], %s27
      %s30 = sshll.u32 [#allocation7], 4
      %s31 = int_to_ptr.vmem [resolvable:$true] %s30
      %33 = dma.hbm_to_vmem [thread:$0]  %s2, 256, %s31, [#allocation4]
    $region13: #{tpu_custom_call.1} parent=1 // pred_fallthru
      _
    // Predicated region
    $region14: #{tpu_custom_call.1} parent=1 // pred_check
      _
    $region15: #{tpu_custom_call.1} parent=1 // pred_check_branch
      %35 = sbr.rel (0) target = $region17
    $region16: #{tpu_custom_call.1} parent=1 // pred_region
      %36 = dma.done [#allocation6], 16
    $region17: #{tpu_custom_call.1} parent=1 // pred_fallthru
      _
    // Predicated region
    $region18: #{tpu_custom_call.1} parent=1 // pred_check
      _
    $region19: #{tpu_custom_call.1} parent=1 // pred_check_branch
      %38 = sbr.rel (0) target = $region21
    $region20: #{tpu_custom_call.1} parent=1 // pred_region
      %39 = dma.done [#allocation4], 256
    $region21: #{tpu_custom_call.1} parent=1 // pred_fallthru
      _
    %40 = sfence
    %v41 = vld [vmem:[#allocation7] ss:$8 sm:$0x3]
    %s42 = sld [smem:[#allocation3]]
    %v43 = vstv %s42
    %v44 = vmul.f32 %v41, %v43
    %s45 = scalar_lea.vmem [#allocation7], 1
    %v46 = vld [vmem:[%s45] ss:$8 sm:$0x3]
    %s47 = sld [smem:[#allocation3 + $0x1]]
    %v48 = vstv %s47
    %v49 = vmul.f32 %v46, %v48
    %v50 = vadd.f32 %v44, %v49
    %s51 = scalar_lea.vmem [#allocation7], 2
    %v52 = vld [vmem:[%s51] ss:$8 sm:$0x3]
    %s53 = sld [smem:[#allocation3 + $0x2]]
    %v54 = vstv %s53
    %v55 = vmul.f32 %v52, %v54
    %v56 = vadd.f32 %v50, %v55
    %s57 = scalar_lea.vmem [#allocation7], 3
    %v58 = vld [vmem:[%s57] ss:$8 sm:$0x3]
    %s59 = sld [smem:[#allocation3 + $0x3]]
    %v60 = vstv %s59
    %v61 = vmul.f32 %v58, %v60
    %v62 = vadd.f32 %v56, %v61
    %s63 = scalar_lea.vmem [#allocation7], 4
    %v64 = vld [vmem:[%s63] ss:$8 sm:$0x3]
    %s65 = sld [smem:[#allocation3 + $0x4]]
    %v66 = vstv %s65
    %v67 = vmul.f32 %v64, %v66
    %v68 = vadd.f32 %v62, %v67
    %s69 = sld [smem:[#allocation2]]
    %v70 = vstv %s69
    %v71 = vadd.f32 %v68, %v70
    %v72 = vlaneseq
    %vm73 = vcmp.ge.s32.totalorder %v72, 0
    %vm74 = vcmp.lt.s32.totalorder %v72, 200
    %vm75 = vmand %vm73, %vm74
    %76 = vst.msk [vmem:[#allocation8] sm:$0x3] %vm75, %v71
    // Predicated region
    $region22: #{tpu_custom_call.1} parent=1 // pred_check
      _
    $region23: #{tpu_custom_call.1} parent=1 // pred_check_branch
      %78 = sbr.rel (0) target = $region25
    $region24: #{tpu_custom_call.1} parent=1 // pred_region
      %s80 = ssub.s32 32, 32
      %81 = vsyncadd [#allocation5], %s80
      %s83 = sshll.u32 [#allocation8], 4
      %s84 = int_to_ptr.vmem [resolvable:$true] %s83
      %86 = dma.vmem_to_hbm [thread:$0]  %s84, 32, %s3, [#allocation5]
    $region25: #{tpu_custom_call.1} parent=1 // pred_fallthru
      _
    // Predicated region
    $region26: #{tpu_custom_call.1} parent=1 // pred_check
      _
    $region27: #{tpu_custom_call.1} parent=1 // pred_check_branch
      %88 = sbr.rel (0) target = $region29
    $region28: #{tpu_custom_call.1} parent=1 // pred_region
      %89 = dma.done [#allocation5], 32
    $region29: #{tpu_custom_call.1} parent=1 // pred_fallthru
      _
    %90 = vsyncpa [#allocation4], 1
    %91 = vsyncpa [#allocation5], 1
    %92 = vsyncpa [#allocation6], 1

</llo_original>
